<compile_context>
chip_gen: v6e
topology: v6e:2x2x1
jax: 0.10.0
libtpu: 0.0.40
codegen_flags: <defaults>
</compile_context>

<pallas_src>
import jax
import jax.numpy as jnp
from jax.experimental import pallas as pl
from jax.experimental.pallas import tpu as pltpu

RADIUS = 1.0  # projection radius of the instantiated perturbation method


def _l2_ball_proj_kernel(x_ref, o_ref):
    # x_ref / o_ref: (TB, D_pad) VMEM tiles; rows are independent.
    x = x_ref[...]
    if jnp.dtype(x_ref.dtype) == jnp.dtype(jnp.float32):
        sq_norm = jnp.sum(x * x, axis=-1, keepdims=True)      # (TB, 1) lane reduce
        inv_norm = jax.lax.rsqrt(sq_norm)                      # EUP rsqrt (inf at 0)
        # min(1, R * inv_norm): rows inside the ball (incl. zero rows) keep scale 1.
        scale = jnp.minimum(jnp.float32(1.0), jnp.float32(RADIUS) * inv_norm)
        o_ref[...] = x * scale
    else:
        # Sub-32-bit path: keep the f32 upcast inside the reduction expression
        # (no full-tile f32 temporary) and rescale/store in the native dtype.
        xf = x.astype(jnp.float32)
        sq_norm = jnp.sum(xf * xf, axis=-1, keepdims=True)
        inv_norm = jax.lax.rsqrt(sq_norm)
        scale = jnp.minimum(jnp.float32(1.0), jnp.float32(RADIUS) * inv_norm)
        o_ref[...] = x * scale.astype(x.dtype)


def _tpu_memory_profile():
    """Return (vmem_limit_bytes, tile_budget_bytes, multi_core) per TPU generation."""
    phys_vmem = None
    try:
        phys_vmem = int(pltpu.get_tpu_info().vmem_capacity_bytes)
    except Exception:
        phys_vmem = None
    if phys_vmem is not None and phys_vmem >= 96 * 1024 * 1024:
        # v5e / v6e: 128 MiB physical VMEM, one TensorCore per chip.
        return 64 * 1024 * 1024, 56 * 1024 * 1024, False
    # v7x (64 MiB physical / 32 MiB scoped, 2 TensorCores) — or unknown: be conservative.
    return 32 * 1024 * 1024, 28 * 1024 * 1024, True


def _pick_row_tile(B, D_pad, dtype, tile_budget_bytes, multi_core):
    """Dtype/VMEM/generation-aware row-tile choice (sublane-packing aligned)."""
    itemsize = jnp.dtype(dtype).itemsize
    sub = max(8, 32 // itemsize)             # 8 rows (f32), 16 (bf16), 32 (int8/fp8)
    # Resident bytes per tile row: double-buffered in + out native tiles (4x)
    # plus one f32 working row (the reduction's upcast / squared values).
    per_row_bytes = 4 * D_pad * itemsize + 4 * D_pad
    if sub * per_row_bytes > tile_budget_bytes:
        # TODO(synk): implement a D-tiled two-pass (partial-norm accumulate then
        #             rescale) scheme for very wide feature dims.
        raise ValueError(
            f"Feature dim D={D_pad} is too wide for a single sublane-group row "
            f"tile within the {tile_budget_bytes}-byte VMEM tile budget; a "
            "D-tiled two-pass kernel is required.")
    rows_pad = pl.cdiv(B, sub) * sub
    tb = max(sub, (tile_budget_bytes // per_row_bytes) // sub * sub)
    tb = min(tb, rows_pad)
    if multi_core and rows_pad > sub and pl.cdiv(B, tb) < 2:
        # Two-TensorCore chip (v7x): make sure the "parallel" batch axis has at
        # least two balanced blocks so the second core gets work.
        tb = max(sub, pl.cdiv(pl.cdiv(B, sub), 2) * sub)
    return tb


def perturbations_net_forward(x, *, tb=None):
    """Pallas forward for PerturbationsNet (method = L2-ball projection)."""
    B, D = x.shape
    D_pad = pl.cdiv(D, 128) * 128            # lane-dense feature axis (unmasked vst)
    vmem_limit, tile_budget, multi_core = _tpu_memory_profile()
    if tb is None:
        tb = _pick_row_tile(B, D_pad, x.dtype, tile_budget, multi_core)
    # Zero-padding the feature axis does not change the per-row L2 norm.
    x_in = x if D_pad == D else jnp.pad(x, ((0, 0), (0, D_pad - D)))
    grid = (pl.cdiv(B, tb),)
    itemsize = jnp.dtype(x.dtype).itemsize
    cost = pl.CostEstimate(
        flops=3 * B * D_pad,              # square + reduce-add + rescale (approx)
        transcendentals=B,                # one rsqrt per row
        bytes_accessed=2 * B * D_pad * itemsize,
    )
    y = pl.pallas_call(
        _l2_ball_proj_kernel,
        out_shape=jax.ShapeDtypeStruct((B, D_pad), x.dtype),
        grid_spec=pl.GridSpec(
            grid=grid,
            in_specs=[pl.BlockSpec((tb, D_pad), lambda i: (i, 0))],
            out_specs=pl.BlockSpec((tb, D_pad), lambda i: (i, 0)),
        ),
        compiler_params=pltpu.CompilerParams(
            dimension_semantics=("parallel",),
            vmem_limit_bytes=vmem_limit,
        ),
        cost_estimate=cost,
    )(x_in)
    return y if D_pad == D else y[:, :D]


if __name__ == "__main__":
    key = jax.random.PRNGKey(0)
    # Small shapes: B=20 is NOT a multiple of the auto-picked row tile and D=300
    # is NOT a multiple of 128, so both the padded tail block and the lane-axis
    # zero-padding path are exercised.
    B, D = 20, 300
    # Mix of rows inside and outside the unit ball.
    x = jax.random.normal(key, (B, D), dtype=jnp.float32) * 2.0

    y = perturbations_net_forward(x)
    jax.block_until_ready(y)

    # Pure-JAX reference of method().forward(x).
    norms = jnp.linalg.norm(x, axis=-1, keepdims=True)
    ref = x * jnp.minimum(jnp.float32(1.0), RADIUS / norms)
    assert y.shape == x.shape and y.dtype == x.dtype
    assert jnp.allclose(y, ref, atol=1e-5, rtol=1e-5), \
        "Pallas output mismatch vs reference"

    print("KERNEL_OK")
</pallas_src>

<mosaic_0001>
module attributes {stable_mosaic.version = 11 : i64} {
  func.func @_l2_ball_proj_kernel(%arg0: i32, %arg1: memref<16x384xf32, #tpu.memory_space<vmem>>, %arg2: memref<16x384xf32, #tpu.memory_space<vmem>>) attributes {dimension_semantics = [#tpu.dimension_semantics<parallel>], iteration_bounds = array<i64: 2>, scalar_prefetch = 0 : i64, scratch_operands = 0 : i64, tpu.core_type = #tpu.core_type<tc>, window_params = [{transform_indices = @transform_0, window_bounds = array<i64: 16, 384>}, {transform_indices = @transform_1, window_bounds = array<i64: 16, 384>}]} {
    %c0 = arith.constant 0 : index
    %c0_0 = arith.constant 0 : index
    %0 = vector.load %arg1[%c0, %c0_0] : memref<16x384xf32, #tpu.memory_space<vmem>>, vector<16x384xf32>
    %1 = arith.mulf %0, %0 : vector<16x384xf32>
    %cst = arith.constant dense<0.000000e+00> : vector<16xf32>
    %2 = vector.multi_reduction <add>, %1, %cst [1] : vector<16x384xf32> to vector<16xf32>
    %3 = vector.shape_cast %2 : vector<16xf32> to vector<16x1xf32>
    %4 = math.rsqrt %3 : vector<16x1xf32>
    %cst_1 = arith.constant 1.000000e+00 : f32
    %5 = vector.broadcast %cst_1 : f32 to vector<16x1xf32>
    %6 = arith.mulf %5, %4 : vector<16x1xf32>
    %cst_2 = arith.constant 1.000000e+00 : f32
    %7 = vector.broadcast %cst_2 : f32 to vector<16x1xf32>
    %8 = arith.minimumf %7, %6 : vector<16x1xf32>
    %9 = vector.broadcast %8 : vector<16x1xf32> to vector<16x384xf32>
    %10 = arith.mulf %0, %9 : vector<16x384xf32>
    %c0_3 = arith.constant 0 : index
    %c0_4 = arith.constant 0 : index
    %11 = vector.load %arg2[%c0_3, %c0_4] : memref<16x384xf32, #tpu.memory_space<vmem>>, vector<16x384xf32>
    tpu.vector_store %arg2[%c0_3, %c0_4], %10 {strides = array<i32>} : memref<16x384xf32, #tpu.memory_space<vmem>>, vector<16x384xf32>,
    return
  }
  func.func @transform_0(%arg0: i32) -> (i32, i32) {
    %c0_i32 = arith.constant 0 : i32
    %c0_i32_0 = arith.constant 0 : i32
    return %arg0, %c0_i32 : i32, i32
  }
  func.func @transform_1(%arg0: i32) -> (i32, i32) {
    %c0_i32 = arith.constant 0 : i32
    %c0_i32_0 = arith.constant 0 : i32
    return %arg0, %c0_i32 : i32, i32
  }
}

</mosaic_0001>

<llo_original>
// kernel: tpu_custom_call.1
$region0: #{tpu_custom_call.1}
  #allocation0 [shape = 'u32[]', space=smem, size = 0x4, offset = 0x4, fixed_abs, tag = 'smem constant byte address 0x4 - core index']
  #allocation1 [shape = 'u32[144,128]{1,0:T(1,128)}', space=vmem, size = 0x12000, scoped, tag = 'internal scratch']
  %s0 = inlined_call_operand.hbm [shape: f32[20,384], index: 0, kind: input, shape index: {}]
  %s1 = inlined_call_operand.hbm [shape: f32[20,384], index: 1, kind: output, shape index: {}]
  %s2 = sld [smem:[#allocation0]]
  $region41: #{tpu_custom_call.1} parent=0
    _
  %s4 = ssub.s32 1, %s2
  %s5 = scalar_select 0, %s4, %s2
  $region1: #{tpu_custom_call.1} parent=0
    #allocation2 [shape = 'u8[49152]{0}', space=vmem, size = 0xc000, scoped, tag = 'input window, operand 0']
    #allocation3 [shape = 's32[2]{0}', space=sflag, size = 0x8, scoped, tag = 'scoped memory for tpu_custom_call.1']
    #allocation4 [shape = 's32[2]{0}', space=sflag, size = 0x8, scoped, tag = 'scoped memory for tpu_custom_call.1']
    #allocation5 [shape = 'u8[49152]{0}', space=vmem, size = 0xc000, scoped, tag = 'output window, operand 0']
    %6 = vsyncpa [#allocation3], 0
    %s7 = scalar_lea.sflag [#allocation3], 1
    %8 = vsyncpa %s7, 0
    %9 = vsyncpa [#allocation4], 0
    %s10 = scalar_lea.sflag [#allocation4], 1
    %11 = vsyncpa %s10, 0
    loop: start=0, step=1, limit=4
    $region2: #{tpu_custom_call.1} parent=1 // loop_pre_header
      _
    $region3: #{tpu_custom_call.1} parent=1 // loop_header
      %s13 = sphi 0, %s17
      %p14 = scmp.ge.s32.totalorder %s13, 4
      %s23 = sphi 0, %s25
      %s26 = sphi 0, %s23
      %s27 = sphi 0, %s26
      %s43 = sphi 0, %s27
      %s49 = sphi 0, %s51
      %s52 = sphi 0, %s49
      %s53 = sphi 0, %s52
      %s69 = sphi 0, %s53
    $region4: #{tpu_custom_call.1} parent=1 // loop_header_branch
      %16 = sbr.rel (%p14) target = $region8
    $region5: #{tpu_custom_call.1} parent=1 // loop_body
      %s18 = ssub.s32 %s13, 1
      %s19 = ssub.s32 %s13, 2
      %s20 = sadd.s32 %s13, 1
      %s21 = ssub.s32 %s13, %s20
      %p22 = scmp.eq.s32.totalorder %s21, 0
      %s24 = sadd.s32 %s23, 1
      %s25 = scalar_select %p22, %s23, %s24
      %p28 = pneg %p22
      %p29 = scmp.eq.s32.totalorder %s13, 1
      %p30 = por %p28, %p29
      %p31 = scmp.ne.s32.totalorder %s23, %s26
      %p32 = scmp.eq.s32.totalorder %s13, 0
      %p33 = por %p31, %p32
      %p34 = scmp.ne.s32.totalorder %s23, %s26
      %p35 = scmp.eq.s32.totalorder %s18, 1
      %p36 = por %p34, %p35
      %p37 = scmp.ne.s32.totalorder %s26, %s27
      %p38 = scmp.eq.s32.totalorder %s18, 0
      %p39 = por %p37, %p38
      %p40 = scmp.ne.s32.totalorder %s26, %s27
      %p41 = scmp.eq.s32.totalorder %s19, 1
      %p42 = por %p40, %p41
      %p44 = scmp.ne.s32.totalorder %s27, %s43
      %p45 = scmp.eq.s32.totalorder %s19, 0
      %p46 = por %p44, %p45
      %s47 = ssub.s32 %s13, %s20
      %p48 = scmp.eq.s32.totalorder %s47, 0
      %s50 = sadd.s32 %s49, 1
      %s51 = scalar_select %p48, %s49, %s50
      %p54 = pneg %p48
      %p55 = scmp.eq.s32.totalorder %s13, 1
      %p56 = por %p54, %p55
      %p57 = scmp.ne.s32.totalorder %s49, %s52
      %p58 = scmp.eq.s32.totalorder %s13, 0
      %p59 = por %p57, %p58
      %p60 = scmp.ne.s32.totalorder %s49, %s52
      %p61 = scmp.eq.s32.totalorder %s18, 1
      %p62 = por %p60, %p61
      %p63 = scmp.ne.s32.totalorder %s52, %s53
      %p64 = scmp.eq.s32.totalorder %s18, 0
      %p65 = por %p63, %p64
      %p66 = scmp.ne.s32.totalorder %s52, %s53
      %p67 = scmp.eq.s32.totalorder %s19, 1
      %p68 = por %p66, %p67
      %p70 = scmp.ne.s32.totalorder %s53, %s69
      %p71 = scmp.eq.s32.totalorder %s19, 0
      %p72 = por %p70, %p71
      %p73 = scmp.le.s32.totalorder 1, %s13
      %p74 = scmp.lt.s32.totalorder %s13, 3
      %p75 = pnand %p73, %p74
      %p76 = pneg %p75
      // Predicated region
      $region9: #{tpu_custom_call.1} parent=5 // pred_check
        _
      $region10: #{tpu_custom_call.1} parent=5 // pred_check_branch
        %78 = sbr.rel (%p75) target = $region12
      $region11: #{tpu_custom_call.1} parent=5 // pred_region
        %s79 = ssub.s32 %s13, 1
      $region12: #{tpu_custom_call.1} parent=5 // pred_fallthru
        _
      %p80 = scmp.lt.s32.totalorder %s13, 2
      // Predicated region
      $region13: #{tpu_custom_call.1} parent=5 // pred_check
        %p81 = pneg %p80
      $region14: #{tpu_custom_call.1} parent=5 // pred_check_branch
        %83 = sbr.rel (%p81) target = $region16
      $region15: #{tpu_custom_call.1} parent=5 // pred_region
        // Predicated region
        $region17: #{tpu_custom_call.1} parent=15 // pred_check
          %p84 = pneg %p33
        $region18: #{tpu_custom_call.1} parent=15 // pred_check_branch
          %86 = sbr.rel (%p84) target = $region20
        $region19: #{tpu_custom_call.1} parent=15 // pred_region
          %s87 = sand.u32 %s23, 1
          %s88 = scalar_lea.sflag [#allocation3], %s87
          %s89 = sand.u32 %s23, 1
          %s90 = smul.addr %s89, 48
          %s91 = scalar_lea.vmem [#allocation2], %s90
          %s92 = smul.u32 2, %s13
          %s93 = ssub.s32 3, %s92
          %p94 = scmp.lt.s32.totalorder %s93, 2
          %s95 = scalar_select %p94, %s93, 2
          %s96 = smul.u32 128, %s95
          %s97 = smul.u32 %s96, 3
          %s99 = ssub.s32 768, %s97
          %100 = vsyncadd %s88, %s99
          %p101 = scmp.ne.s32.totalorder 0, %s97
          %s102 = smul.addr %s92, 3
          %s103 = smul.addr %s102, 128
          %s104 = scalar_lea.hbm %s0, %s103
          %s105 = smul.u32 24, %s95
          %s106 = sshll.u32 %s91, 4
          %s107 = int_to_ptr.vmem [resolvable:$true] %s106
          %s108 = sshll.u32 %s105, 4
          %112 = dma.hbm_to_vmem [thread:$0]  (%p101), %s104, %s108, %s107, %s88, 384, 384, 24
        $region20: #{tpu_custom_call.1} parent=15 // pred_fallthru
          _
      $region16: #{tpu_custom_call.1} parent=5 // pred_fallthru
        _
      %p113 = scmp.le.s32.totalorder 1, %s13
      %p114 = scmp.lt.s32.totalorder %s13, 3
      %p115 = pnand %p113, %p114
      %p116 = pneg %p115
      // Predicated region
      $region21: #{tpu_custom_call.1} parent=5 // pred_check
        _
      $region22: #{tpu_custom_call.1} parent=5 // pred_check_branch
        %118 = sbr.rel (%p115) target = $region24
      $region23: #{tpu_custom_call.1} parent=5 // pred_region
        %s119 = ssub.s32 %s13, 1
        %s120 = sand.u32 %s26, 1
        %s121 = scalar_lea.sflag [#allocation3], %s120
        %s122 = sand.u32 %s26, 1
        %s123 = smul.addr %s122, 48
        %s124 = scalar_lea.vmem [#allocation2], %s123
        // Predicated region
        $region25: #{tpu_custom_call.1} parent=23 // pred_check
          %p125 = pneg %p39
        $region26: #{tpu_custom_call.1} parent=23 // pred_check_branch
          %127 = sbr.rel (%p125) target = $region28
        $region27: #{tpu_custom_call.1} parent=23 // pred_region
          %128 = dma.done %s121, 768
        $region28: #{tpu_custom_call.1} parent=23 // pred_fallthru
          _
        %s129 = sand.u32 %s26, 1
        %s130 = scalar_lea.sflag [#allocation3], %s129
        %s131 = sand.u32 %s26, 1
        %s132 = smul.addr %s131, 48
        %s133 = scalar_lea.vmem [#allocation2], %s132
        %p134 = pneg %p39
        %p135 = pneg %p36
        %p136 = pneg %p65
        %p137 = pneg %p62
        %s138 = sand.u32 %s52, 1
        %s139 = scalar_lea.sflag [#allocation4], %s138
        %s140 = sand.u32 %s52, 1
        %s141 = smul.addr %s140, 48
        %s142 = scalar_lea.vmem [#allocation5], %s141
        %s143 = smul.u32 2, %s18
        %s144 = ssub.s32 3, %s143
        %p145 = scmp.lt.s32.totalorder %s144, 2
        %s146 = scalar_select %p145, %s144, 2
        %s147 = smul.u32 128, %s146
        %s148 = smul.u32 %s147, 3
        %s149 = smul.u32 2, %s18
        %s150 = ssub.s32 3, %s149
        %p151 = scmp.lt.s32.totalorder %s150, 2
        %s152 = scalar_select %p151, %s150, 2
        %s153 = smul.u32 128, %s152
        %s154 = smul.u32 %s153, 3
        %v155 = vld [vmem:[%s124] sm:$0xff]
        %v156 = vld [vmem:[%s124 + $0x8] sm:$0xff]
        %v157 = vld [vmem:[%s124 + $0x10] sm:$0xff]
        %v158 = vld [vmem:[%s124 + $0x18] sm:$0xff]
        %v159 = vld [vmem:[%s124 + $0x20] sm:$0xff]
        %v160 = vld [vmem:[%s124 + $0x28] sm:$0xff]
        %v161 = vmul.f32 %v155, %v155
        %v162 = vmul.f32 %v156, %v156
        %v163 = vmul.f32 %v157, %v157
        %v164 = vmul.f32 %v158, %v158
        %v165 = vmul.f32 %v159, %v159
        %v166 = vmul.f32 %v160, %v160
        %v167 = vadd.f32 %v161, %v162
        %v168 = vadd.f32 %v167, %v163
        %169 = vadd.xlane.f32.xlu0 %v168
        %v170 = vpop.xlane.xlu0 %169
        %v171 = vadd.f32 %v164, %v165
        %v172 = vadd.f32 %v171, %v166
        %173 = vadd.xlane.f32.xlu0 %v172
        %v174 = vpop.xlane.xlu0 %173
        %v175 = vrsqrt.pop %v170
        %v176 = vrsqrt.pop %v174
        %v177 = vmin.f32 %v175, 1.0
        %v178 = vmin.f32 %v176, 1.0
        %v179 = vmul.f32 %v155, %v177
        %v180 = vmul.f32 %v156, %v177
        %v181 = vmul.f32 %v157, %v177
        %v182 = vmul.f32 %v158, %v178
        %v183 = vmul.f32 %v159, %v178
        %v184 = vmul.f32 %v160, %v178
        %185 = vst [vmem:[%s142] sm:$0xff] %v179
        %186 = vst [vmem:[%s142 + $0x8] sm:$0xff] %v180
        %187 = vst [vmem:[%s142 + $0x10] sm:$0xff] %v181
        %188 = vst [vmem:[%s142 + $0x18] sm:$0xff] %v182
        %189 = vst [vmem:[%s142 + $0x20] sm:$0xff] %v183
        %190 = vst [vmem:[%s142 + $0x28] sm:$0xff] %v184
        %s191 = sand.u32 %s52, 1
        %s192 = scalar_lea.sflag [#allocation4], %s191
        %s193 = sand.u32 %s52, 1
        %s194 = smul.addr %s193, 48
        %s195 = scalar_lea.vmem [#allocation5], %s194
        // Predicated region
        $region29: #{tpu_custom_call.1} parent=23 // pred_check
          %p196 = pneg %p62
        $region30: #{tpu_custom_call.1} parent=23 // pred_check_branch
          %198 = sbr.rel (%p196) target = $region32
        $region31: #{tpu_custom_call.1} parent=23 // pred_region
          %s199 = smul.u32 2, %s18
          %s200 = ssub.s32 3, %s199
          %p201 = scmp.lt.s32.totalorder %s200, 2
          %s202 = scalar_select %p201, %s200, 2
          %s203 = smul.u32 128, %s202
          %s204 = smul.u32 %s203, 3
          %s206 = ssub.s32 768, %s204
          %207 = vsyncadd %s192, %s206
          %p208 = scmp.ne.s32.totalorder 0, %s204
          %s209 = smul.addr %s199, 3
          %s210 = smul.addr %s209, 128
          %s211 = scalar_lea.hbm %s1, %s210
          %s212 = smul.u32 24, %s202
          %s213 = sshll.u32 %s195, 4
          %s214 = int_to_ptr.vmem [resolvable:$true] %s213
          %s215 = sshll.u32 %s212, 4
          %219 = dma.vmem_to_hbm [thread:$0]  (%p208), %s214, %s215, %s211, %s192, 384, 384, 24
        $region32: #{tpu_custom_call.1} parent=23 // pred_fallthru
          _
      $region24: #{tpu_custom_call.1} parent=5 // pred_fallthru
        _
      %p220 = scmp.le.s32.totalorder 2, %s13
      // Predicated region
      $region33: #{tpu_custom_call.1} parent=5 // pred_check
        %p221 = pneg %p220
      $region34: #{tpu_custom_call.1} parent=5 // pred_check_branch
        %223 = sbr.rel (%p221) target = $region36
      $region35: #{tpu_custom_call.1} parent=5 // pred_region
        %s224 = ssub.s32 %s13, 2
        // Predicated region
        $region37: #{tpu_custom_call.1} parent=35 // pred_check
          %p225 = pneg %p68
        $region38: #{tpu_custom_call.1} parent=35 // pred_check_branch
          %227 = sbr.rel (%p225) target = $region40
        $region39: #{tpu_custom_call.1} parent=35 // pred_region
          %s228 = sand.u32 %s53, 1
          %s229 = scalar_lea.sflag [#allocation4], %s228
          %s230 = sand.u32 %s53, 1
          %s231 = smul.addr %s230, 48
          %s232 = scalar_lea.vmem [#allocation5], %s231
          %233 = dma.done %s229, 768
        $region40: #{tpu_custom_call.1} parent=35 // pred_fallthru
          _
      $region36: #{tpu_custom_call.1} parent=5 // pred_fallthru
        _
    $region6: #{tpu_custom_call.1} parent=1 // loop_footer
      %s17 = sadd.s32 1, %s13
    $region7: #{tpu_custom_call.1} parent=1 // loop_footer_branch
      %12 = sbr.rel target = $region3
    $region8: #{tpu_custom_call.1} parent=1 // loop_exit
      _
    %234 = vsyncpa [#allocation3], 1
    %s235 = scalar_lea.sflag [#allocation3], 1
    %236 = vsyncpa %s235, 1
    %237 = vsyncpa [#allocation4], 1
    %s238 = scalar_lea.sflag [#allocation4], 1
    %239 = vsyncpa %s238, 1

</llo_original>
